<compile_context>
chip_gen: v5e
topology: v5e:2x2
jax: 0.10.0
libtpu: 0.0.40
codegen_flags: <defaults>
</compile_context>

<pallas_src>
import functools
import math

import jax
import jax.numpy as jnp
from jax.experimental import pallas as pl
from jax.experimental.pallas import tpu as pltpu

_LANE = 128      # lane width (last dim)
_SUBLANE = 8     # sublane width (second-to-last dim)


def _round_up(x, m):
    return (x + m - 1) // m * m


def _cdiv(a, b):
    return (a + b - 1) // b


def _vn_update_kernel(x_ref, wt_ref, o_ref, *, x_cast_dtype):
    # One MXU matmul per (N, M) tile, f32 accumulation. The weight tile is
    # already stored in the compute dtype (packed at init), so no cast here;
    # x is cast only if a reduced-precision weight path was requested.
    x = x_ref[...]
    if x_cast_dtype is not None:
        x = x.astype(x_cast_dtype)
    o_ref[...] = jnp.dot(
        x, wt_ref[...], preferred_element_type=jnp.float32
    ).astype(o_ref.dtype)


def init_vn_update_params(key, in_features, out_features, layer_mask):
    """Deterministic re-implementation of VnUpdateLayer.reset_parameters()."""
    # xavier_uniform_: U(-a, a), a = sqrt(6 / (fan_in + fan_out))
    a = math.sqrt(6.0 / (in_features + out_features))
    weight = jax.random.uniform(
        key, (out_features, in_features), dtype=jnp.float32, minval=-a, maxval=a
    )
    weight = weight * layer_mask.astype(jnp.float32)   # sparsify (Tanner mask)
    bias = jnp.zeros((out_features,), dtype=jnp.float32)  # unused in forward
    return weight, bias


def pack_vn_weight(weight, compute_dtype=jnp.float32):
    """One-time (init-time) packing of the masked weight for the kernel.

    Transposes (out, in) -> (in, out), zero-pads the output axis to a multiple
    of 128 lanes (lane-dense stores), and casts to the compute dtype so the
    kernel never re-casts the resident weight tile and DMA bytes are minimal.
    Do NOT call this per forward pass.

    compute_dtype=jnp.float32   -> exact PyTorch f32 numerics (default).
    compute_dtype=jnp.bfloat16  -> halves weight DMA bytes on v6e/v7x.
    # TODO(synk): optional int8 weight quantization (v5e/v6e MXU only; v7x has
    # no integer MXU modes) is not implemented.
    """
    out_features, in_features = weight.shape
    n_pad = _round_up(out_features, _LANE)
    w_t = jnp.zeros((in_features, n_pad), dtype=compute_dtype)
    w_t = w_t.at[:, :out_features].set(weight.T.astype(compute_dtype))
    return w_t


def vn_update_forward(x, w_t_packed, out_features, *,
                      block_m=512, block_n=512,
                      vmem_cap_bytes=48 << 20,
                      keep_padded_output=False):
    """y = x @ weight.T  via a Pallas TPU kernel.

    x:          (batch, in_features)
    w_t_packed: (in_features, round_up(out_features, 128)) from pack_vn_weight()
                (already masked, transposed, lane-padded, in compute dtype).
    Returns (batch, out_features)  (or (batch, n_pad) if keep_padded_output).
    """
    m, k = x.shape
    k2, n_pad = w_t_packed.shape
    assert k == k2 and n_pad % _LANE == 0

    x_item = jnp.dtype(x.dtype).itemsize
    w_item = jnp.dtype(w_t_packed.dtype).itemsize

    # 8-aligned M tiles, 128-aligned N tiles (keeps the (8,128) BlockSpec rule
    # even for odd block_m/block_n arguments).
    block_m = max(_SUBLANE, _round_up(block_m, _SUBLANE))
    block_n = max(_LANE, _round_up(block_n, _LANE))
    tm = min(_round_up(m, _SUBLANE), block_m)
    tn = min(n_pad, block_n)

    def _budget(tm_, tn_):
        w_bufs = 1 if _cdiv(n_pad, tn_) == 1 else 2   # resident weight -> 1 buffer
        return (w_bufs * k * tn_ * w_item
                + 2 * tm_ * k * x_item                # double-buffered x tiles
                + 2 * tm_ * tn_ * x_item)             # double-buffered out tiles

    # Shrink tiles until the estimated VMEM footprint fits the cap
    # (48 MiB default leaves headroom on v7x's 64 MiB physical VMEM).
    while _budget(tm, tn) > vmem_cap_bytes and tm > _SUBLANE:
        tm = max(_SUBLANE, _round_up(tm // 2, _SUBLANE))
    while _budget(tm, tn) > vmem_cap_bytes and tn > _LANE:
        tn = max(_LANE, _round_up(tn // 2, _LANE))
    # TODO(synk): if k * tn alone cannot fit VMEM (very large in_features), add
    # a K grid axis with a VMEM f32 accumulator + pl.when init/finalize.

    m_steps = _cdiv(m, tm)     # ragged last tile -> no wrapper-side zero-pad of x
    n_steps = _cdiv(n_pad, tn)
    grid = (n_steps, m_steps)  # M innermost: weight tile stays resident across M

    x_cast_dtype = w_t_packed.dtype if x.dtype != w_t_packed.dtype else None
    kernel = functools.partial(_vn_update_kernel, x_cast_dtype=x_cast_dtype)

    # Explicit VMEM limit (scoped defaults differ per generation: 16/32/32 MiB).
    vmem_limit = int(min(max(2 * _budget(tm, tn) + (4 << 20), 8 << 20), 64 << 20))
    params = pltpu.CompilerParams(
        dimension_semantics=("parallel", "parallel"),
        vmem_limit_bytes=vmem_limit,
    )

    x_spec = pl.BlockSpec((tm, k), lambda j, i: (i, 0))
    out_spec = pl.BlockSpec((tm, tn), lambda j, i: (i, j))   # lane-dense stores
    out_shape = jax.ShapeDtypeStruct((m, n_pad), x.dtype)

    def _call(w_spec):
        return pl.pallas_call(
            kernel,
            out_shape=out_shape,
            grid=grid,
            in_specs=[x_spec, w_spec],
            out_specs=out_spec,
            compiler_params=params,
        )(x, w_t_packed)

    if n_steps == 1:
        # Weight index_map is constant across the grid -> single-buffer it
        # (double-buffering a never-changing tile only wastes VMEM).
        try:
            y_pad = _call(pl.BlockSpec((k, tn), lambda j, i: (0, j),
                                       pipeline_mode=pl.Buffered(1)))
        except Exception:
            # Fallback: default (double-buffered) pipelining if single-buffer
            # mode is rejected by this Pallas/Mosaic version.
            y_pad = _call(pl.BlockSpec((k, tn), lambda j, i: (0, j)))
    else:
        y_pad = _call(pl.BlockSpec((k, tn), lambda j, i: (0, j)))

    if keep_padded_output or out_features == n_pad:
        return y_pad
    return y_pad[:, :out_features]


if __name__ == "__main__":
    # Small shapes consistent with the module: a (masked) linear layer.
    batch = 8
    in_features = 32
    out_features = 16

    root = jax.random.PRNGKey(0)
    k_mask, k_w, k_x = jax.random.split(root, 3)

    # Deterministic synthetic sparsity mask (like a Tanner-graph mask).
    layer_mask = (
        jax.random.uniform(k_mask, (out_features, in_features)) < 0.5
    ).astype(jnp.float32)

    weight, bias = init_vn_update_params(k_w, in_features, out_features, layer_mask)

    # Init-time packing: transpose + lane pad + compute-dtype cast — hoisted
    # out of forward. f32 default preserves PyTorch numerics exactly; pass
    # compute_dtype=jnp.bfloat16 on v6e/v7x when the call is DMA-bound.
    w_t_packed = pack_vn_weight(weight, compute_dtype=jnp.float32)

    x = jax.random.normal(k_x, (batch, in_features), dtype=jnp.float32)

    y = vn_update_forward(x, w_t_packed, out_features)
    y = jax.block_until_ready(y)

    # Sanity check against plain-JAX reference of the PyTorch forward.
    y_ref = x @ weight.T
    assert y.shape == (batch, out_features)
    assert jnp.allclose(y, y_ref, atol=1e-5, rtol=1e-5)

    # TODO(synk): apply_sparse_mask() is a training-time gradient hook and has
    # no forward-pass Pallas equivalent; it is intentionally not implemented.

    print("KERNEL_OK")
</pallas_src>

<mosaic_0001>
module attributes {stable_mosaic.version = 11 : i64} {
  func.func @_vn_update_kernel(%arg0: i32, %arg1: i32, %arg2: memref<8x32xf32, #tpu.memory_space<vmem>>, %arg3: memref<32x128xf32, #tpu.memory_space<vmem>>, %arg4: memref<8x128xf32, #tpu.memory_space<vmem>>) attributes {dimension_semantics = [#tpu.dimension_semantics<parallel>, #tpu.dimension_semantics<parallel>], iteration_bounds = array<i64: 1, 1>, scalar_prefetch = 0 : i64, scratch_operands = 0 : i64, tpu.core_type = #tpu.core_type<tc>, window_params = [{transform_indices = @transform_0, window_bounds = array<i64: 8, 32>}, {pipeline_mode = #tpu.pipeline_mode<synchronous>, transform_indices = @transform_1, window_bounds = array<i64: 32, 128>}, {transform_indices = @transform_2, window_bounds = array<i64: 8, 128>}]} {
    %c0 = arith.constant 0 : index
    %c0_0 = arith.constant 0 : index
    %0 = vector.load %arg2[%c0, %c0_0] : memref<8x32xf32, #tpu.memory_space<vmem>>, vector<8x32xf32>
    %c0_1 = arith.constant 0 : index
    %c0_2 = arith.constant 0 : index
    %1 = vector.load %arg3[%c0_1, %c0_2] : memref<32x128xf32, #tpu.memory_space<vmem>>, vector<32x128xf32>
    %cst = arith.constant dense<0.000000e+00> : vector<8x128xf32>
    %2 = tpu.matmul %0, %1, %cst {dimension_numbers = #tpu.dot_dimension_numbers<[1], [0], [0], [1], [0, 0, 1, 1], [], []>} : vector<8x32xf32>, vector<32x128xf32>, vector<8x128xf32> -> vector<8x128xf32>
    %c0_3 = arith.constant 0 : index
    %c0_4 = arith.constant 0 : index
    %3 = vector.load %arg4[%c0_3, %c0_4] : memref<8x128xf32, #tpu.memory_space<vmem>>, vector<8x128xf32>
    tpu.vector_store %arg4[%c0_3, %c0_4], %2 {strides = array<i32>} : memref<8x128xf32, #tpu.memory_space<vmem>>, vector<8x128xf32>,
    return
  }
  func.func @transform_0(%arg0: i32, %arg1: i32) -> (i32, i32) {
    %c0_i32 = arith.constant 0 : i32
    %c0_i32_0 = arith.constant 0 : i32
    return %arg1, %c0_i32 : i32, i32
  }
  func.func @transform_1(%arg0: i32, %arg1: i32) -> (i32, i32) {
    %c0_i32 = arith.constant 0 : i32
    %c0_i32_0 = arith.constant 0 : i32
    return %c0_i32, %arg0 : i32, i32
  }
  func.func @transform_2(%arg0: i32, %arg1: i32) -> (i32, i32) {
    %c0_i32 = arith.constant 0 : i32
    return %arg1, %arg0 : i32, i32
  }
}

module attributes {stable_mosaic.version = 11 : i64} {
  func.func @_vn_update_kernel(%arg0: i32, %arg1: i32, %arg2: memref<8x32xf32, #tpu.memory_space<vmem>>, %arg3: memref<32x128xf32, #tpu.memory_space<vmem>>, %arg4: memref<8x128xf32, #tpu.memory_space<vmem>>) attributes {dimension_semantics = [#tpu.dimension_semantics<parallel>, #tpu.dimension_semantics<parallel>], iteration_bounds = array<i64: 1, 1>, scalar_prefetch = 0 : i64, scratch_operands = 0 : i64, tpu.core_type = #tpu.core_type<tc>, window_params = [{transform_indices = @transform_0, window_bounds = array<i64: 8, 32>}, {transform_indices = @transform_1, window_bounds = array<i64: 32, 128>}, {transform_indices = @transform_2, window_bounds = array<i64: 8, 128>}]} {
    %c0 = arith.constant 0 : index
    %c0_0 = arith.constant 0 : index
    %0 = vector.load %arg2[%c0, %c0_0] : memref<8x32xf32, #tpu.memory_space<vmem>>, vector<8x32xf32>
    %c0_1 = arith.constant 0 : index
    %c0_2 = arith.constant 0 : index
    %1 = vector.load %arg3[%c0_1, %c0_2] : memref<32x128xf32, #tpu.memory_space<vmem>>, vector<32x128xf32>
    %cst = arith.constant dense<0.000000e+00> : vector<8x128xf32>
    %2 = tpu.matmul %0, %1, %cst {dimension_numbers = #tpu.dot_dimension_numbers<[1], [0], [0], [1], [0, 0, 1, 1], [], []>} : vector<8x32xf32>, vector<32x128xf32>, vector<8x128xf32> -> vector<8x128xf32>
    %c0_3 = arith.constant 0 : index
    %c0_4 = arith.constant 0 : index
    %3 = vector.load %arg4[%c0_3, %c0_4] : memref<8x128xf32, #tpu.memory_space<vmem>>, vector<8x128xf32>
    tpu.vector_store %arg4[%c0_3, %c0_4], %2 {strides = array<i32>} : memref<8x128xf32, #tpu.memory_space<vmem>>, vector<8x128xf32>,
    return
  }
  func.func @transform_0(%arg0: i32, %arg1: i32) -> (i32, i32) {
    %c0_i32 = arith.constant 0 : i32
    %c0_i32_0 = arith.constant 0 : i32
    return %arg1, %c0_i32 : i32, i32
  }
  func.func @transform_1(%arg0: i32, %arg1: i32) -> (i32, i32) {
    %c0_i32 = arith.constant 0 : i32
    %c0_i32_0 = arith.constant 0 : i32
    return %c0_i32, %arg0 : i32, i32
  }
  func.func @transform_2(%arg0: i32, %arg1: i32) -> (i32, i32) {
    %c0_i32 = arith.constant 0 : i32
    return %arg1, %arg0 : i32, i32
  }
}

</mosaic_0001>

<llo_original>
// kernel: tpu_custom_call.1
$region0: #{tpu_custom_call.1}
  #allocation0 [shape = 'u32[]', space=smem, size = 0x4, offset = 0x4, fixed_abs, tag = 'smem constant byte address 0x4 - core index']
  #allocation1 [shape = 'u32[72,128]{1,0:T(1,128)}', space=vmem, size = 0x9000, scoped, tag = 'internal scratch']
  %s0 = inlined_call_operand.hbm [shape: f32[8,32], index: 0, kind: input, shape index: {}]
  %s1 = inlined_call_operand.hbm [shape: f32[32,128], index: 1, kind: input, shape index: {}]
  %s2 = inlined_call_operand.hbm [shape: f32[8,128], index: 2, kind: output, shape index: {}]
  %s3 = sld [smem:[#allocation0]]
  $region26: #{tpu_custom_call.1} parent=0
    _
  %s5 = ssub.s32 1, %s3
  %s6 = scalar_select 0, %s5, %s3
  $region1: #{tpu_custom_call.1} parent=0
    #allocation2 [shape = 'u8[4096]{0}', space=vmem, size = 0x1000, scoped, tag = 'input window, operand 0, single buffered']
    #allocation3 [shape = 's32[1]{0}', space=sflag, size = 0x4, scoped, tag = 'scoped memory for tpu_custom_call.1']
    #allocation4 [shape = 's32[1]{0}', space=sflag, size = 0x4, scoped, tag = 'scoped memory for tpu_custom_call.1']
    #allocation5 [shape = 'u8[16384]{0}', space=vmem, size = 0x4000, scoped, tag = 'input window, operand 1, single buffered']
    #allocation6 [shape = 's32[1]{0}', space=sflag, size = 0x4, scoped, tag = 'scoped memory for tpu_custom_call.1']
    #allocation7 [shape = 'u8[4096]{0}', space=vmem, size = 0x1000, scoped, tag = 'output window, operand 0, single buffered']
    %7 = vsyncpa [#allocation3], 0
    %8 = vsyncpa [#allocation6], 0
    %9 = vsyncpa [#allocation4], 0
    // Predicated region
    $region2: #{tpu_custom_call.1} parent=1 // pred_check
      _
    $region3: #{tpu_custom_call.1} parent=1 // pred_check_branch
      %11 = sbr.rel (0) target = $region5
    $region4: #{tpu_custom_call.1} parent=1 // pred_region
      %13 = vsyncadd [#allocation3], 0
      %s15 = sshll.u32 %s0, 4
      %s16 = int_to_ptr.hbm [resolvable:$true] %s15
      %s17 = sshll.u32 [#allocation2], 4
      %s18 = int_to_ptr.vmem [resolvable:$true] %s17
      %20 = dma.hbm_to_vmem [thread:$0]  %s16, 128, %s18, [#allocation3]
    $region5: #{tpu_custom_call.1} parent=1 // pred_fallthru
      _
    // Predicated region
    $region6: #{tpu_custom_call.1} parent=1 // pred_check
      _
    $region7: #{tpu_custom_call.1} parent=1 // pred_check_branch
      %22 = sbr.rel (0) target = $region9
    $region8: #{tpu_custom_call.1} parent=1 // pred_region
      %24 = vsyncadd [#allocation6], 0
      %s25 = sshll.u32 %s1, 4
      %s26 = int_to_ptr.hbm [resolvable:$true] %s25
      %s27 = sshll.u32 [#allocation5], 4
      %s28 = int_to_ptr.vmem [resolvable:$true] %s27
      %33 = dma.hbm_to_vmem [thread:$0]  %s26, 512, %s28, [#allocation6], 128, 128, 8
    $region9: #{tpu_custom_call.1} parent=1 // pred_fallthru
      _
    // Predicated region
    $region10: #{tpu_custom_call.1} parent=1 // pred_check
      _
    $region11: #{tpu_custom_call.1} parent=1 // pred_check_branch
      %35 = sbr.rel (0) target = $region13
    $region12: #{tpu_custom_call.1} parent=1 // pred_region
      %37 = dma.done [#allocation3], 128
    $region13: #{tpu_custom_call.1} parent=1 // pred_fallthru
      _
    // Predicated region
    $region14: #{tpu_custom_call.1} parent=1 // pred_check
      _
    $region15: #{tpu_custom_call.1} parent=1 // pred_check_branch
      %39 = sbr.rel (0) target = $region17
    $region16: #{tpu_custom_call.1} parent=1 // pred_region
      %41 = dma.done [#allocation6], 512
    $region17: #{tpu_custom_call.1} parent=1 // pred_fallthru
      _
    %v42 = vld [vmem:[#allocation2] sm:$0xff]
    %v43 = vld [vmem:[#allocation5] sm:$0xff]
    %v44 = vld [vmem:[#allocation5 + $0x8] sm:$0xff]
    %v45 = vld [vmem:[#allocation5 + $0x10] sm:$0xff]
    %v46 = vld [vmem:[#allocation5 + $0x18] sm:$0xff]
    %vm47 = vcmask 261120
    %v49 = vsel %vm47, %v42, 0
    %51 = vmatpush.msra.mxu0 0.0
    %52 = vmatpush.msra.mxu0 0.0
    %53 = vmatpush.msra.mxu0 0.0
    %54 = vmatpush.msra.mxu0 0.0
    %55 = vmatpush.msra.mxu0 0.0
    %56 = vmatpush.msra.mxu0 0.0
    %57 = vmatpush.msra.mxu0 0.0
    %58 = vmatpush.msra.mxu0 0.0
    %59 = vmatpush.msra.mxu0 0.0
    %60 = vmatpush.msra.mxu0 0.0
    %61 = vmatpush.msra.mxu0 0.0
    %62 = vmatpush.msra.mxu0 0.0
    %63 = vmatpush.msra.mxu0 %v46
    %64 = vmatpush.msra.mxu0 %v45
    %65 = vmatpush.msra.mxu0 %v44
    %66 = vmatpush.msra.mxu0 %v43
    %67 = vmatmul.f32.gmra.mxu0 %v49
    %v68 = vpop.f32.mrf.mxu0
    %v69 = vadd.f32 0.0, %v68
    %70 = vdwg.mxu0
    %71 = vst [vmem:[#allocation7] sm:$0xff] %v69
    // Predicated region
    $region18: #{tpu_custom_call.1} parent=1 // pred_check
      _
    $region19: #{tpu_custom_call.1} parent=1 // pred_check_branch
      %73 = sbr.rel (0) target = $region21
    $region20: #{tpu_custom_call.1} parent=1 // pred_region
      %75 = vsyncadd [#allocation4], 0
      %s77 = sshll.u32 [#allocation7], 4
      %s78 = int_to_ptr.vmem [resolvable:$true] %s77
      %s79 = sshll.u32 %s2, 4
      %s80 = int_to_ptr.hbm [resolvable:$true] %s79
      %82 = dma.vmem_to_hbm [thread:$0]  %s78, 128, %s80, [#allocation4]
    $region21: #{tpu_custom_call.1} parent=1 // pred_fallthru
      _
    // Predicated region
    $region22: #{tpu_custom_call.1} parent=1 // pred_check
      _
    $region23: #{tpu_custom_call.1} parent=1 // pred_check_branch
      %84 = sbr.rel (0) target = $region25
    $region24: #{tpu_custom_call.1} parent=1 // pred_region
      %86 = dma.done [#allocation4], 128
    $region25: #{tpu_custom_call.1} parent=1 // pred_fallthru
      _
    %87 = vsyncpa [#allocation3], 1
    %88 = vsyncpa [#allocation6], 1
    %89 = vsyncpa [#allocation4], 1

// kernel: tpu_custom_call.1
$region0: #{tpu_custom_call.1}
  #allocation0 [shape = 'u32[]', space=smem, size = 0x4, offset = 0x4, fixed_abs, tag = 'smem constant byte address 0x4 - core index']
  #allocation1 [shape = 'u32[72,128]{1,0:T(1,128)}', space=vmem, size = 0x9000, scoped, tag = 'internal scratch']
  %s0 = inlined_call_operand.hbm [shape: f32[8,32], index: 0, kind: input, shape index: {}]
  %s1 = inlined_call_operand.hbm [shape: f32[32,128], index: 1, kind: input, shape index: {}]
  %s2 = inlined_call_operand.hbm [shape: f32[8,128], index: 2, kind: output, shape index: {}]
  %s3 = sld [smem:[#allocation0]]
  $region26: #{tpu_custom_call.1} parent=0
    _
  %s5 = ssub.s32 1, %s3
  %s6 = scalar_select 0, %s5, %s3
  $region1: #{tpu_custom_call.1} parent=0
    #allocation2 [shape = 'u8[4096]{0}', space=vmem, size = 0x1000, scoped, tag = 'input window, operand 0, single buffered']
    #allocation3 [shape = 's32[1]{0}', space=sflag, size = 0x4, scoped, tag = 'scoped memory for tpu_custom_call.1']
    #allocation4 [shape = 's32[1]{0}', space=sflag, size = 0x4, scoped, tag = 'scoped memory for tpu_custom_call.1']
    #allocation5 [shape = 'u8[16384]{0}', space=vmem, size = 0x4000, scoped, tag = 'input window, operand 1, single buffered']
    #allocation6 [shape = 's32[1]{0}', space=sflag, size = 0x4, scoped, tag = 'scoped memory for tpu_custom_call.1']
    #allocation7 [shape = 'u8[4096]{0}', space=vmem, size = 0x1000, scoped, tag = 'output window, operand 0, single buffered']
    %7 = vsyncpa [#allocation3], 0
    %8 = vsyncpa [#allocation6], 0
    %9 = vsyncpa [#allocation4], 0
    // Predicated region
    $region2: #{tpu_custom_call.1} parent=1 // pred_check
      _
    $region3: #{tpu_custom_call.1} parent=1 // pred_check_branch
      %11 = sbr.rel (0) target = $region5
    $region4: #{tpu_custom_call.1} parent=1 // pred_region
      %13 = vsyncadd [#allocation3], 0
      %s15 = sshll.u32 %s0, 4
      %s16 = int_to_ptr.hbm [resolvable:$true] %s15
      %s17 = sshll.u32 [#allocation2], 4
      %s18 = int_to_ptr.vmem [resolvable:$true] %s17
      %20 = dma.hbm_to_vmem [thread:$0]  %s16, 128, %s18, [#allocation3]
    $region5: #{tpu_custom_call.1} parent=1 // pred_fallthru
      _
    // Predicated region
    $region6: #{tpu_custom_call.1} parent=1 // pred_check
      _
    $region7: #{tpu_custom_call.1} parent=1 // pred_check_branch
      %22 = sbr.rel (0) target = $region9
    $region8: #{tpu_custom_call.1} parent=1 // pred_region
      %24 = vsyncadd [#allocation6], 0
      %s25 = sshll.u32 %s1, 4
      %s26 = int_to_ptr.hbm [resolvable:$true] %s25
      %s27 = sshll.u32 [#allocation5], 4
      %s28 = int_to_ptr.vmem [resolvable:$true] %s27
      %33 = dma.hbm_to_vmem [thread:$0]  %s26, 512, %s28, [#allocation6], 128, 128, 8
    $region9: #{tpu_custom_call.1} parent=1 // pred_fallthru
      _
    // Predicated region
    $region10: #{tpu_custom_call.1} parent=1 // pred_check
      _
    $region11: #{tpu_custom_call.1} parent=1 // pred_check_branch
      %35 = sbr.rel (0) target = $region13
    $region12: #{tpu_custom_call.1} parent=1 // pred_region
      %37 = dma.done [#allocation3], 128
    $region13: #{tpu_custom_call.1} parent=1 // pred_fallthru
      _
    // Predicated region
    $region14: #{tpu_custom_call.1} parent=1 // pred_check
      _
    $region15: #{tpu_custom_call.1} parent=1 // pred_check_branch
      %39 = sbr.rel (0) target = $region17
    $region16: #{tpu_custom_call.1} parent=1 // pred_region
      %41 = dma.done [#allocation6], 512
    $region17: #{tpu_custom_call.1} parent=1 // pred_fallthru
      _
    %v42 = vld [vmem:[#allocation2] sm:$0xff]
    %v43 = vld [vmem:[#allocation5] sm:$0xff]
    %v44 = vld [vmem:[#allocation5 + $0x8] sm:$0xff]
    %v45 = vld [vmem:[#allocation5 + $0x10] sm:$0xff]
    %v46 = vld [vmem:[#allocation5 + $0x18] sm:$0xff]
    %vm47 = vcmask 261120
    %v49 = vsel %vm47, %v42, 0
    %51 = vmatpush.msra.mxu0 0.0
    %52 = vmatpush.msra.mxu0 0.0
    %53 = vmatpush.msra.mxu0 0.0
    %54 = vmatpush.msra.mxu0 0.0
    %55 = vmatpush.msra.mxu0 0.0
    %56 = vmatpush.msra.mxu0 0.0
    %57 = vmatpush.msra.mxu0 0.0
    %58 = vmatpush.msra.mxu0 0.0
    %59 = vmatpush.msra.mxu0 0.0
    %60 = vmatpush.msra.mxu0 0.0
    %61 = vmatpush.msra.mxu0 0.0
    %62 = vmatpush.msra.mxu0 0.0
    %63 = vmatpush.msra.mxu0 %v46
    %64 = vmatpush.msra.mxu0 %v45
    %65 = vmatpush.msra.mxu0 %v44
    %66 = vmatpush.msra.mxu0 %v43
    %67 = vmatmul.f32.gmra.mxu0 %v49
    %v68 = vpop.f32.mrf.mxu0
    %v69 = vadd.f32 0.0, %v68
    %70 = vdwg.mxu0
    %71 = vst [vmem:[#allocation7] sm:$0xff] %v69
    // Predicated region
    $region18: #{tpu_custom_call.1} parent=1 // pred_check
      _
    $region19: #{tpu_custom_call.1} parent=1 // pred_check_branch
      %73 = sbr.rel (0) target = $region21
    $region20: #{tpu_custom_call.1} parent=1 // pred_region
      %75 = vsyncadd [#allocation4], 0
      %s77 = sshll.u32 [#allocation7], 4
      %s78 = int_to_ptr.vmem [resolvable:$true] %s77
      %s79 = sshll.u32 %s2, 4
      %s80 = int_to_ptr.hbm [resolvable:$true] %s79
      %82 = dma.vmem_to_hbm [thread:$0]  %s78, 128, %s80, [#allocation4]
    $region21: #{tpu_custom_call.1} parent=1 // pred_fallthru
      _
    // Predicated region
    $region22: #{tpu_custom_call.1} parent=1 // pred_check
      _
    $region23: #{tpu_custom_call.1} parent=1 // pred_check_branch
      %84 = sbr.rel (0) target = $region25
    $region24: #{tpu_custom_call.1} parent=1 // pred_region
      %86 = dma.done [#allocation4], 128
    $region25: #{tpu_custom_call.1} parent=1 // pred_fallthru
      _
    %87 = vsyncpa [#allocation3], 1
    %88 = vsyncpa [#allocation6], 1
    %89 = vsyncpa [#allocation4], 1

</llo_original>
